<compile_context>
chip_gen: v7x
topology: tpu7x:2x2x1
jax: 0.10.0
libtpu: 0.0.40
codegen_flags: <defaults>
</compile_context>

<pallas_src>
import functools

import jax
import jax.numpy as jnp
from jax.experimental import pallas as pl
from jax.experimental.pallas import tpu as pltpu

LN_EPS = 1e-5


def _round_up(n, m):
    return ((n + m - 1) // m) * m


def _feature_enhance_kernel(x_ref,
                            wcat_ref,          # (D, 2*Hp)  [W1' | Ws], LN1 folded into W1'
                            cs1_ref,           # (1, Hp)    column sums of W1' (1^T W1')
                            b1_ref,            # (1, Hp)    b1 + beta1 @ W1
                            w2_ref, b2_ref,    # (Hp, Hp), (1, Hp)
                            g2_ref, be2_ref,   # (1, Hp)    LN2 gamma/beta (zero-padded)
                            mask_ref,          # (1, Hp)    {1,0} lane mask for the true H
                            bs_ref,            # (1, Hp)    shortcut bias
                            o_ref,
                            *, hp, h_true, apply_mask):
    x_raw = x_ref[...]
    x = x_raw.astype(jnp.float32)                            # (TM, D)

    # --- LayerNorm statistics over input_dim (gamma/beta already folded into W1'/b1') ---
    mu = jnp.mean(x, axis=-1, keepdims=True)
    var = jnp.mean((x - mu) ** 2, axis=-1, keepdims=True)
    rstd = jax.lax.rsqrt(var + LN_EPS)

    # --- Fused MXU pass: one LHS trip through [W1' | Ws] (D -> 2*Hp) ---
    wcat = wcat_ref[...]
    y = jnp.dot(x_raw.astype(wcat.dtype), wcat,
                preferred_element_type=jnp.float32)          # (TM, 2*Hp)
    y1 = y[:, :hp]                                           # x @ W1'
    ys = y[:, hp:]                                           # x @ Ws   (shortcut)

    # xn @ W1' == rstd*(x @ W1') - (mu*rstd)*(1^T W1')
    h = rstd * y1 - (mu * rstd) * cs1_ref[...] + b1_ref[...]
    h = jnp.maximum(h, 0.0)
    # Dropout(0.1): identity in eval/inference mode.
    # TODO(synk): stochastic dropout via pltpu.prng_random_bits if training semantics are needed.

    # --- Linear(H, H) ---
    w2 = w2_ref[...]
    h2 = jnp.dot(h.astype(w2.dtype), w2,
                 preferred_element_type=jnp.float32) + b2_ref[...]

    # --- LayerNorm over the TRUE hidden dim ---
    # Padded lanes of h2 are exactly zero (zero-padded W1'/W2 columns, rows and
    # biases), so the sum over all Hp lanes equals the sum over the true H.
    inv_h = 1.0 / float(h_true)
    mu2 = jnp.sum(h2, axis=-1, keepdims=True) * inv_h
    d2 = h2 - mu2
    if apply_mask:
        d2 = d2 * mask_ref[...]          # precomputed lane mask (no per-step iota)
    var2 = jnp.sum(d2 * d2, axis=-1, keepdims=True) * inv_h
    # Padded lanes: gamma = beta = 0 (and d2 = 0 when masked) -> stay exactly 0.
    hn = d2 * jax.lax.rsqrt(var2 + LN_EPS) * g2_ref[...] + be2_ref[...]

    # --- residual: enhance + shortcut ---
    o_ref[...] = (hn + ys + bs_ref[...]).astype(o_ref.dtype)


def _pad_last(a, new_size):
    if a.shape[-1] == new_size:
        return a
    pad = [(0, 0)] * a.ndim
    pad[-1] = (0, new_size - a.shape[-1])
    return jnp.pad(a, pad)


def feature_enhancement(x, params, *, row_tile=512, mxu_dtype=jnp.bfloat16,
                        out_dtype=None):
    """x: (..., input_dim) -> (..., hidden_dim).

    row_tile:  rows per grid step (multiple of 8); large tiles amortize the
               ~0.35us/step overhead and feed the MXU a big M.  Clamped so the
               grid keeps >= 2 steps (megacore) and to the 8-aligned row count.
    mxu_dtype: dtype of the matmul operands.  bf16 (default) is recommended on
               v5e/v6e/v7x; pass jnp.float32 (or None) for full-f32 operands.
               LN / bias / residual math is always done in f32.
    out_dtype: output dtype (defaults to x.dtype); bf16 halves write traffic in
               the memory-bound regime if downstream allows it.
    """
    lead_shape = x.shape[:-1]
    D = x.shape[-1]
    H = params["w2"].shape[-1]
    out_dtype = x.dtype if out_dtype is None else out_dtype
    if mxu_dtype is None:
        mxu_dtype = jnp.float32

    x2 = x.reshape(-1, D)
    N = x2.shape[0]
    n8 = _round_up(N, 8)

    # Row tile: 8-aligned, no larger than the row count, and (when possible)
    # no larger than half of it so dimension_semantics=("parallel",) can shard
    # the grid across both v7x TensorCores.
    row_tile = _round_up(max(int(row_tile), 8), 8)
    row_tile = min(row_tile, n8)
    if n8 >= 16:
        row_tile = min(row_tile, _round_up(n8 // 2, 8))
    row_tile = max(row_tile, 8)

    Np = _round_up(N, row_tile)
    if Np != N:
        x2 = jnp.pad(x2, ((0, Np - N), (0, 0)))

    # Lane-dense hidden dim: pad H to a multiple of 128 (unmasked vst stores).
    Hp = _round_up(max(H, 128), 128)

    f32 = jnp.float32
    g1 = params["ln1_g"].astype(f32)                          # (1, D)
    be1 = params["ln1_b"].astype(f32)                         # (1, D)
    w1 = params["w1"].astype(f32)                             # (D, H)
    b1 = params["b1"].astype(f32)                             # (1, H)

    # Fold LN1 gamma/beta into the first linear:
    #   ((x-mu)*rstd*g + b) @ W1 + b1 == ((x-mu)*rstd) @ (g^T * W1) + (b @ W1 + b1)
    w1f = w1 * g1.reshape(D, 1)
    b1f = b1 + be1 @ w1

    w1p = _pad_last(w1f, Hp).astype(mxu_dtype)                               # (D, Hp)
    wsp = _pad_last(params["ws"].astype(f32), Hp).astype(mxu_dtype)          # (D, Hp)
    wcat = jnp.concatenate([w1p, wsp], axis=1)                               # (D, 2*Hp)
    # Column sums of the *cast* W1' so the post-matmul affine identity holds
    # to f32 precision even with bf16 operands.
    cs1 = jnp.sum(w1p.astype(f32), axis=0, keepdims=True)                    # (1, Hp)

    b1p = _pad_last(b1f, Hp)                                                 # (1, Hp)
    w2p = jnp.pad(params["w2"].astype(f32),
                  ((0, Hp - H), (0, Hp - H))).astype(mxu_dtype)              # (Hp, Hp)
    b2p = _pad_last(params["b2"].astype(f32), Hp)
    g2p = _pad_last(params["ln2_g"].astype(f32), Hp)
    be2p = _pad_last(params["ln2_b"].astype(f32), Hp)
    bsp = _pad_last(params["bs"].astype(f32), Hp)
    maskp = (jnp.arange(Hp) < H).astype(f32).reshape(1, Hp)                  # (1, Hp)

    x_item = jnp.dtype(x2.dtype).itemsize
    out_item = jnp.dtype(out_dtype).itemsize
    w_item = jnp.dtype(wcat.dtype).itemsize

    # VMEM footprint: single-buffered weights + double-buffered activation tiles.
    weight_bytes = (D * 2 * Hp + Hp * Hp) * w_item
    vec_bytes = 7 * 8 * Hp * 4                           # (1,Hp) consts, sublane-padded
    act_bytes = 2 * row_tile * (D * x_item + Hp * out_item)
    footprint = weight_bytes + vec_bytes + act_bytes

    # Generation-aware scoped-VMEM limit: ~75% of physical VMEM as headroom for
    # Mosaic internal scratch (v7x: ~48 MiB of 64; v5e/v6e: ~96 MiB of 128).
    try:
        vmem_cap = int(pltpu.get_tpu_info().vmem_capacity_bytes)
    except Exception:
        vmem_cap = 64 * 1024 * 1024                       # conservative (v7x per-TC)
    vmem_limit = int(min(max(int(1.3 * footprint), 32 * 1024 * 1024),
                         int(vmem_cap * 0.75)))

    # Advisory cost estimate so XLA can schedule around this custom call.
    flops = 2 * Np * (2 * D * Hp + Hp * Hp)
    bytes_accessed = (Np * D * x_item + Np * Hp * out_item
                      + weight_bytes + 7 * Hp * 4)
    cost = pl.CostEstimate(flops=flops, transcendentals=2 * Np,
                           bytes_accessed=bytes_accessed)

    # Constant blocks: index_map never changes -> single buffer (no DMA to hide).
    def const(shape):
        return pl.BlockSpec(shape, lambda i: (0, 0), pipeline_mode=pl.Buffered(1))

    kernel = functools.partial(_feature_enhance_kernel,
                               hp=Hp, h_true=H, apply_mask=(Hp != H))

    out = pl.pallas_call(
        kernel,
        out_shape=jax.ShapeDtypeStruct((Np, Hp), out_dtype),
        grid_spec=pltpu.PrefetchScalarGridSpec(
            num_scalar_prefetch=0,
            grid=(Np // row_tile,),
            in_specs=[
                pl.BlockSpec((row_tile, D), lambda i: (i, 0)),   # x tile (double-buffered)
                const((D, 2 * Hp)),                              # [W1' | Ws]
                const((1, Hp)),                                  # 1^T W1'
                const((1, Hp)),                                  # b1'
                const((Hp, Hp)), const((1, Hp)),                 # W2, b2
                const((1, Hp)), const((1, Hp)),                  # LN2 gamma, beta
                const((1, Hp)),                                  # lane mask
                const((1, Hp)),                                  # shortcut bias
            ],
            out_specs=pl.BlockSpec((row_tile, Hp), lambda i: (i, 0)),
        ),
        compiler_params=pltpu.CompilerParams(
            dimension_semantics=("parallel",),
            vmem_limit_bytes=vmem_limit),
        cost_estimate=cost,
    )(x2, wcat, cs1, b1p, w2p, b2p, g2p, be2p, maskp, bsp)

    out = out[:N, :H]
    return out.reshape(*lead_shape, H)


def init_params(key, input_dim, hidden_dim, dtype=jnp.float32):
    """Deterministic synthetic init (shapes match the PyTorch module)."""
    ks = jax.random.split(key, 6)
    s1 = 1.0 / jnp.sqrt(input_dim)
    s2 = 1.0 / jnp.sqrt(hidden_dim)
    return {
        "ln1_g": jnp.ones((1, input_dim), dtype),
        "ln1_b": jnp.zeros((1, input_dim), dtype),
        "w1": jax.random.uniform(ks[0], (input_dim, hidden_dim), dtype, -s1, s1),
        "b1": jax.random.uniform(ks[1], (1, hidden_dim), dtype, -s1, s1),
        "w2": jax.random.uniform(ks[2], (hidden_dim, hidden_dim), dtype, -s2, s2),
        "b2": jax.random.uniform(ks[3], (1, hidden_dim), dtype, -s2, s2),
        "ln2_g": jnp.ones((1, hidden_dim), dtype),
        "ln2_b": jnp.zeros((1, hidden_dim), dtype),
        "ws": jax.random.uniform(ks[4], (input_dim, hidden_dim), dtype, -s1, s1),
        "bs": jax.random.uniform(ks[5], (1, hidden_dim), dtype, -s1, s1),
    }


def reference(x, p):
    """Pure-JAX reference of the PyTorch forward (eval mode)."""
    def ln(v, g, b):
        mu = jnp.mean(v, axis=-1, keepdims=True)
        var = jnp.mean((v - mu) ** 2, axis=-1, keepdims=True)
        return (v - mu) * jax.lax.rsqrt(var + LN_EPS) * g + b
    xn = ln(x, p["ln1_g"], p["ln1_b"])
    h = jnp.maximum(xn @ p["w1"] + p["b1"], 0.0)
    h2 = h @ p["w2"] + p["b2"]
    out = ln(h2, p["ln2_g"], p["ln2_b"])
    return out + (x @ p["ws"] + p["bs"])


if __name__ == "__main__":
    batch, seq = 2, 8
    input_dim, hidden_dim = 32, 64

    key = jax.random.PRNGKey(0)
    kx, kp = jax.random.split(key)
    x = jax.random.normal(kx, (batch, seq, input_dim), dtype=jnp.float32)
    params = init_params(kp, input_dim, hidden_dim)

    ref = reference(x.reshape(-1, input_dim), params).reshape(batch, seq, hidden_dim)

    # Full-f32 MXU operands: tight check against the pure-JAX reference.
    out_f32 = feature_enhancement(x, params, mxu_dtype=jnp.float32)
    out_f32 = jax.block_until_ready(out_f32)
    assert out_f32.shape == (batch, seq, hidden_dim)
    assert jnp.allclose(out_f32, ref, atol=1e-4, rtol=1e-4), \
        float(jnp.max(jnp.abs(out_f32 - ref)))

    # Default path: bf16 MXU operands (recommended on v5e/v6e/v7x); looser tolerance.
    out_bf16 = feature_enhancement(x, params)
    out_bf16 = jax.block_until_ready(out_bf16)
    assert out_bf16.shape == (batch, seq, hidden_dim)
    assert jnp.allclose(out_bf16, ref, atol=5e-2, rtol=5e-2), \
        float(jnp.max(jnp.abs(out_bf16 - ref)))

    print("KERNEL_OK")
</pallas_src>

<mosaic_0001>
module attributes {stable_mosaic.version = 11 : i64} {
  func.func @_feature_enhance_kernel(%arg0: i32, %arg1: memref<8x32xf32, #tpu.memory_space<vmem>>, %arg2: memref<32x256xf32, #tpu.memory_space<vmem>>, %arg3: memref<1x128xf32, #tpu.memory_space<vmem>>, %arg4: memref<1x128xf32, #tpu.memory_space<vmem>>, %arg5: memref<128x128xf32, #tpu.memory_space<vmem>>, %arg6: memref<1x128xf32, #tpu.memory_space<vmem>>, %arg7: memref<1x128xf32, #tpu.memory_space<vmem>>, %arg8: memref<1x128xf32, #tpu.memory_space<vmem>>, %arg9: memref<1x128xf32, #tpu.memory_space<vmem>>, %arg10: memref<1x128xf32, #tpu.memory_space<vmem>>, %arg11: memref<8x128xf32, #tpu.memory_space<vmem>>) attributes {dimension_semantics = [#tpu.dimension_semantics<parallel>], iteration_bounds = array<i64: 2>, scalar_prefetch = 0 : i64, scratch_operands = 0 : i64, tpu.core_type = #tpu.core_type<tc>, window_params = [{transform_indices = @transform_0, window_bounds = array<i64: 8, 32>}, {pipeline_mode = #tpu.pipeline_mode<synchronous>, transform_indices = @transform_1, window_bounds = array<i64: 32, 256>}, {pipeline_mode = #tpu.pipeline_mode<synchronous>, transform_indices = @transform_2, window_bounds = array<i64: 1, 128>}, {pipeline_mode = #tpu.pipeline_mode<synchronous>, transform_indices = @transform_3, window_bounds = array<i64: 1, 128>}, {pipeline_mode = #tpu.pipeline_mode<synchronous>, transform_indices = @transform_4, window_bounds = array<i64: 128, 128>}, {pipeline_mode = #tpu.pipeline_mode<synchronous>, transform_indices = @transform_5, window_bounds = array<i64: 1, 128>}, {pipeline_mode = #tpu.pipeline_mode<synchronous>, transform_indices = @transform_6, window_bounds = array<i64: 1, 128>}, {pipeline_mode = #tpu.pipeline_mode<synchronous>, transform_indices = @transform_7, window_bounds = array<i64: 1, 128>}, {pipeline_mode = #tpu.pipeline_mode<synchronous>, transform_indices = @transform_8, window_bounds = array<i64: 1, 128>}, {pipeline_mode = #tpu.pipeline_mode<synchronous>, transform_indices = @transform_9, window_bounds = array<i64: 1, 128>}, {transform_indices = @transform_10, window_bounds = array<i64: 8, 128>}]} {
    %c0 = arith.constant 0 : index
    %c0_0 = arith.constant 0 : index
    %0 = vector.load %arg1[%c0, %c0_0] : memref<8x32xf32, #tpu.memory_space<vmem>>, vector<8x32xf32>
    %cst = arith.constant dense<0.000000e+00> : vector<8xf32>
    %1 = vector.multi_reduction <add>, %0, %cst [1] : vector<8x32xf32> to vector<8xf32>
    %2 = vector.shape_cast %1 : vector<8xf32> to vector<8x1xf32>
    %cst_1 = arith.constant 3.200000e+01 : f32
    %3 = vector.broadcast %cst_1 : f32 to vector<8x1xf32>
    %4 = arith.divf %2, %3 : vector<8x1xf32>
    %5 = vector.broadcast %4 : vector<8x1xf32> to vector<8x32xf32>
    %6 = arith.subf %0, %5 : vector<8x32xf32>
    %7 = arith.mulf %6, %6 : vector<8x32xf32>
    %cst_2 = arith.constant dense<0.000000e+00> : vector<8xf32>
    %8 = vector.multi_reduction <add>, %7, %cst_2 [1] : vector<8x32xf32> to vector<8xf32>
    %9 = vector.shape_cast %8 : vector<8xf32> to vector<8x1xf32>
    %cst_3 = arith.constant 3.200000e+01 : f32
    %10 = vector.broadcast %cst_3 : f32 to vector<8x1xf32>
    %11 = arith.divf %9, %10 : vector<8x1xf32>
    %cst_4 = arith.constant 9.99999974E-6 : f32
    %12 = vector.broadcast %cst_4 : f32 to vector<8x1xf32>
    %13 = arith.addf %11, %12 : vector<8x1xf32>
    %14 = math.rsqrt %13 : vector<8x1xf32>
    %c0_5 = arith.constant 0 : index
    %c0_6 = arith.constant 0 : index
    %15 = vector.load %arg2[%c0_5, %c0_6] : memref<32x256xf32, #tpu.memory_space<vmem>>, vector<32x256xf32>
    %cst_7 = arith.constant dense<0.000000e+00> : vector<8x256xf32>
    %16 = tpu.matmul %0, %15, %cst_7 {dimension_numbers = #tpu.dot_dimension_numbers<[1], [0], [0], [1], [0, 0, 1, 1], [], []>} : vector<8x32xf32>, vector<32x256xf32>, vector<8x256xf32> -> vector<8x256xf32>
    %17 = vector.extract_strided_slice %16 {offsets = [0, 0], sizes = [8, 128], strides = [1, 1]} : vector<8x256xf32> to vector<8x128xf32>
    %18 = vector.extract_strided_slice %16 {offsets = [0, 128], sizes = [8, 128], strides = [1, 1]} : vector<8x256xf32> to vector<8x128xf32>
    %19 = vector.broadcast %14 : vector<8x1xf32> to vector<8x128xf32>
    %20 = arith.mulf %19, %17 : vector<8x128xf32>
    %21 = arith.mulf %4, %14 : vector<8x1xf32>
    %c0_8 = arith.constant 0 : index
    %c0_9 = arith.constant 0 : index
    %22 = vector.load %arg3[%c0_8, %c0_9] : memref<1x128xf32, #tpu.memory_space<vmem>>, vector<1x128xf32>
    %23 = vector.broadcast %21 : vector<8x1xf32> to vector<8x128xf32>
    %24 = vector.broadcast %22 : vector<1x128xf32> to vector<8x128xf32>
    %25 = arith.mulf %23, %24 : vector<8x128xf32>
    %26 = arith.subf %20, %25 : vector<8x128xf32>
    %c0_10 = arith.constant 0 : index
    %c0_11 = arith.constant 0 : index
    %27 = vector.load %arg4[%c0_10, %c0_11] : memref<1x128xf32, #tpu.memory_space<vmem>>, vector<1x128xf32>
    %28 = vector.broadcast %27 : vector<1x128xf32> to vector<8x128xf32>
    %29 = arith.addf %26, %28 : vector<8x128xf32>
    %cst_12 = arith.constant 0.000000e+00 : f32
    %30 = vector.broadcast %cst_12 : f32 to vector<8x128xf32>
    %31 = arith.maximumf %29, %30 : vector<8x128xf32>
    %c0_13 = arith.constant 0 : index
    %c0_14 = arith.constant 0 : index
    %32 = vector.load %arg5[%c0_13, %c0_14] : memref<128x128xf32, #tpu.memory_space<vmem>>, vector<128x128xf32>
    %cst_15 = arith.constant dense<0.000000e+00> : vector<8x128xf32>
    %33 = tpu.matmul %31, %32, %cst_15 {dimension_numbers = #tpu.dot_dimension_numbers<[1], [0], [0], [1], [0, 0, 1, 1], [], []>} : vector<8x128xf32>, vector<128x128xf32>, vector<8x128xf32> -> vector<8x128xf32>
    %c0_16 = arith.constant 0 : index
    %c0_17 = arith.constant 0 : index
    %34 = vector.load %arg6[%c0_16, %c0_17] : memref<1x128xf32, #tpu.memory_space<vmem>>, vector<1x128xf32>
    %35 = vector.broadcast %34 : vector<1x128xf32> to vector<8x128xf32>
    %36 = arith.addf %33, %35 : vector<8x128xf32>
    %cst_18 = arith.constant dense<0.000000e+00> : vector<8xf32>
    %37 = vector.multi_reduction <add>, %36, %cst_18 [1] : vector<8x128xf32> to vector<8xf32>
    %38 = vector.shape_cast %37 : vector<8xf32> to vector<8x1xf32>
    %cst_19 = arith.constant 1.562500e-02 : f32
    %39 = vector.broadcast %cst_19 : f32 to vector<8x1xf32>
    %40 = arith.mulf %38, %39 : vector<8x1xf32>
    %41 = vector.broadcast %40 : vector<8x1xf32> to vector<8x128xf32>
    %42 = arith.subf %36, %41 : vector<8x128xf32>
    %c0_20 = arith.constant 0 : index
    %c0_21 = arith.constant 0 : index
    %43 = vector.load %arg9[%c0_20, %c0_21] : memref<1x128xf32, #tpu.memory_space<vmem>>, vector<1x128xf32>
    %44 = vector.broadcast %43 : vector<1x128xf32> to vector<8x128xf32>
    %45 = arith.mulf %42, %44 : vector<8x128xf32>
    %46 = arith.mulf %45, %45 : vector<8x128xf32>
    %cst_22 = arith.constant dense<0.000000e+00> : vector<8xf32>
    %47 = vector.multi_reduction <add>, %46, %cst_22 [1] : vector<8x128xf32> to vector<8xf32>
    %48 = vector.shape_cast %47 : vector<8xf32> to vector<8x1xf32>
    %cst_23 = arith.constant 1.562500e-02 : f32
    %49 = vector.broadcast %cst_23 : f32 to vector<8x1xf32>
    %50 = arith.mulf %48, %49 : vector<8x1xf32>
    %cst_24 = arith.constant 9.99999974E-6 : f32
    %51 = vector.broadcast %cst_24 : f32 to vector<8x1xf32>
    %52 = arith.addf %50, %51 : vector<8x1xf32>
    %53 = math.rsqrt %52 : vector<8x1xf32>
    %54 = vector.broadcast %53 : vector<8x1xf32> to vector<8x128xf32>
    %55 = arith.mulf %45, %54 : vector<8x128xf32>
    %c0_25 = arith.constant 0 : index
    %c0_26 = arith.constant 0 : index
    %56 = vector.load %arg7[%c0_25, %c0_26] : memref<1x128xf32, #tpu.memory_space<vmem>>, vector<1x128xf32>
    %57 = vector.broadcast %56 : vector<1x128xf32> to vector<8x128xf32>
    %58 = arith.mulf %55, %57 : vector<8x128xf32>
    %c0_27 = arith.constant 0 : index
    %c0_28 = arith.constant 0 : index
    %59 = vector.load %arg8[%c0_27, %c0_28] : memref<1x128xf32, #tpu.memory_space<vmem>>, vector<1x128xf32>
    %60 = vector.broadcast %59 : vector<1x128xf32> to vector<8x128xf32>
    %61 = arith.addf %58, %60 : vector<8x128xf32>
    %62 = arith.addf %61, %18 : vector<8x128xf32>
    %c0_29 = arith.constant 0 : index
    %c0_30 = arith.constant 0 : index
    %63 = vector.load %arg10[%c0_29, %c0_30] : memref<1x128xf32, #tpu.memory_space<vmem>>, vector<1x128xf32>
    %64 = vector.broadcast %63 : vector<1x128xf32> to vector<8x128xf32>
    %65 = arith.addf %62, %64 : vector<8x128xf32>
    %c0_31 = arith.constant 0 : index
    %c0_32 = arith.constant 0 : index
    %66 = vector.load %arg11[%c0_31, %c0_32] : memref<8x128xf32, #tpu.memory_space<vmem>>, vector<8x128xf32>
    tpu.vector_store %arg11[%c0_31, %c0_32], %65 {strides = array<i32>} : memref<8x128xf32, #tpu.memory_space<vmem>>, vector<8x128xf32>,
    return
  }
  func.func @transform_0(%arg0: i32) -> (i32, i32) {
    %c0_i32 = arith.constant 0 : i32
    %c0_i32_0 = arith.constant 0 : i32
    return %arg0, %c0_i32 : i32, i32
  }
  func.func @transform_1(%arg0: i32) -> (i32, i32) {
    %c0_i32 = arith.constant 0 : i32
    %c0_i32_0 = arith.constant 0 : i32
    %c0_i32_1 = arith.constant 0 : i32
    return %c0_i32, %c0_i32_0 : i32, i32
  }
  func.func @transform_2(%arg0: i32) -> (i32, i32) {
    %c0_i32 = arith.constant 0 : i32
    %c0_i32_0 = arith.constant 0 : i32
    %c0_i32_1 = arith.constant 0 : i32
    return %c0_i32, %c0_i32_0 : i32, i32
  }
  func.func @transform_3(%arg0: i32) -> (i32, i32) {
    %c0_i32 = arith.constant 0 : i32
    %c0_i32_0 = arith.constant 0 : i32
    %c0_i32_1 = arith.constant 0 : i32
    return %c0_i32, %c0_i32_0 : i32, i32
  }
  func.func @transform_4(%arg0: i32) -> (i32, i32) {
    %c0_i32 = arith.constant 0 : i32
    %c0_i32_0 = arith.constant 0 : i32
    %c0_i32_1 = arith.constant 0 : i32
    return %c0_i32, %c0_i32_0 : i32, i32
  }
  func.func @transform_5(%arg0: i32) -> (i32, i32) {
    %c0_i32 = arith.constant 0 : i32
    %c0_i32_0 = arith.constant 0 : i32
    %c0_i32_1 = arith.constant 0 : i32
    return %c0_i32, %c0_i32_0 : i32, i32
  }
  func.func @transform_6(%arg0: i32) -> (i32, i32) {
    %c0_i32 = arith.constant 0 : i32
    %c0_i32_0 = arith.constant 0 : i32
    %c0_i32_1 = arith.constant 0 : i32
    return %c0_i32, %c0_i32_0 : i32, i32
  }
  func.func @transform_7(%arg0: i32) -> (i32, i32) {
    %c0_i32 = arith.constant 0 : i32
    %c0_i32_0 = arith.constant 0 : i32
    %c0_i32_1 = arith.constant 0 : i32
    return %c0_i32, %c0_i32_0 : i32, i32
  }
  func.func @transform_8(%arg0: i32) -> (i32, i32) {
    %c0_i32 = arith.constant 0 : i32
    %c0_i32_0 = arith.constant 0 : i32
    %c0_i32_1 = arith.constant 0 : i32
    return %c0_i32, %c0_i32_0 : i32, i32
  }
  func.func @transform_9(%arg0: i32) -> (i32, i32) {
    %c0_i32 = arith.constant 0 : i32
    %c0_i32_0 = arith.constant 0 : i32
    %c0_i32_1 = arith.constant 0 : i32
    return %c0_i32, %c0_i32_0 : i32, i32
  }
  func.func @transform_10(%arg0: i32) -> (i32, i32) {
    %c0_i32 = arith.constant 0 : i32
    %c0_i32_0 = arith.constant 0 : i32
    return %arg0, %c0_i32 : i32, i32
  }
}

</mosaic_0001>

<llo_original>
// kernel: tpu_custom_call.1
$region0: #{tpu_custom_call.1}
  #allocation0 [shape = 'u32[]', space=smem, size = 0x4, offset = 0x4, fixed_abs, tag = 'smem constant byte address 0x4 - core index']
  #allocation1 [shape = 'u32[144,128]{1,0:T(1,128)}', space=vmem, size = 0x12000, scoped, tag = 'internal scratch']
  %s0 = inlined_call_operand.hbm [shape: f32[16,32], index: 0, kind: input, shape index: {}]
  %s1 = inlined_call_operand.hbm [shape: f32[32,256], index: 1, kind: input, shape index: {}]
  %s2 = inlined_call_operand.vmem [shape: f32[1,128], index: 2, kind: input, shape index: {}]
  %s3 = inlined_call_operand.vmem [shape: f32[1,128], index: 3, kind: input, shape index: {}]
  %s4 = inlined_call_operand.hbm [shape: f32[128,128], index: 4, kind: input, shape index: {}]
  %s5 = inlined_call_operand.vmem [shape: f32[1,128], index: 5, kind: input, shape index: {}]
  %s6 = inlined_call_operand.vmem [shape: f32[1,128], index: 6, kind: input, shape index: {}]
  %s7 = inlined_call_operand.vmem [shape: f32[1,128], index: 7, kind: input, shape index: {}]
  %s8 = inlined_call_operand.vmem [shape: f32[1,128], index: 8, kind: input, shape index: {}]
  %s9 = inlined_call_operand.vmem [shape: f32[1,128], index: 9, kind: input, shape index: {}]
  %s10 = inlined_call_operand.hbm [shape: f32[16,128], index: 10, kind: output, shape index: {}]
  %s11 = sld [smem:[#allocation0]]
  $region85: #{tpu_custom_call.1} parent=0
    _
  %s13 = ssub.s32 1, %s11
  %s14 = scalar_select 0, %s13, %s11
  $region1: #{tpu_custom_call.1} parent=0
    #allocation2 [shape = 'u8[8192]{0}', space=vmem, size = 0x2000, scoped, tag = 'input window, operand 0']
    #allocation3 [shape = 's32[2]{0}', space=sflag, size = 0x8, scoped, tag = 'scoped memory for tpu_custom_call.1']
    #allocation4 [shape = 's32[2]{0}', space=sflag, size = 0x8, scoped, tag = 'scoped memory for tpu_custom_call.1']
    #allocation5 [shape = 'u8[32768]{0}', space=vmem, size = 0x8000, scoped, tag = 'input window, operand 1, single buffered']
    #allocation6 [shape = 's32[1]{0}', space=sflag, size = 0x4, scoped, tag = 'scoped memory for tpu_custom_call.1']
    #allocation7 [shape = 'u8[65536]{0}', space=vmem, size = 0x10000, scoped, tag = 'input window, operand 4, single buffered']
    #allocation8 [shape = 'u8[8192]{0}', space=vmem, size = 0x2000, scoped, tag = 'output window, operand 0']
    %15 = vsyncpa [#allocation3], 0
    %s16 = scalar_lea.sflag [#allocation3], 1
    %17 = vsyncpa %s16, 0
    %18 = vsyncpa [#allocation6], 0
    %19 = vsyncpa [#allocation4], 0
    %s20 = scalar_lea.sflag [#allocation4], 1
    %21 = vsyncpa %s20, 0
    loop: start=0, step=1, limit=4
    $region2: #{tpu_custom_call.1} parent=1 // loop_pre_header
      _
    $region3: #{tpu_custom_call.1} parent=1 // loop_header
      %s23 = sphi 0, %s27
      %p24 = scmp.ge.s32.totalorder %s23, 4
      %s33 = sphi 0, %s35
      %s36 = sphi 0, %s33
      %s37 = sphi 0, %s36
      %s53 = sphi 0, %s37
      %s57 = sphi 0, %s57
      %s59 = sphi 0, %s57
      %s60 = sphi 0, %s59
      %s74 = sphi 0, %s60
      %s78 = sphi 0, %s78
      %s80 = sphi 0, %s78
      %s81 = sphi 0, %s80
      %s95 = sphi 0, %s81
      %s99 = sphi 0, %s99
      %s101 = sphi 0, %s99
      %s102 = sphi 0, %s101
      %s116 = sphi 0, %s102
      %s120 = sphi 0, %s120
      %s122 = sphi 0, %s120
      %s123 = sphi 0, %s122
      %s137 = sphi 0, %s123
      %s141 = sphi 0, %s141
      %s143 = sphi 0, %s141
      %s144 = sphi 0, %s143
      %s158 = sphi 0, %s144
      %s162 = sphi 0, %s162
      %s164 = sphi 0, %s162
      %s165 = sphi 0, %s164
      %s179 = sphi 0, %s165
      %s183 = sphi 0, %s183
      %s185 = sphi 0, %s183
      %s186 = sphi 0, %s185
      %s200 = sphi 0, %s186
      %s204 = sphi 0, %s204
      %s206 = sphi 0, %s204
      %s207 = sphi 0, %s206
      %s221 = sphi 0, %s207
      %s225 = sphi 0, %s225
      %s227 = sphi 0, %s225
      %s228 = sphi 0, %s227
      %s242 = sphi 0, %s228
      %s248 = sphi 0, %s250
      %s251 = sphi 0, %s248
      %s252 = sphi 0, %s251
      %s268 = sphi 0, %s252
    $region4: #{tpu_custom_call.1} parent=1 // loop_header_branch
      %26 = sbr.rel (%p24) target = $region8
    $region5: #{tpu_custom_call.1} parent=1 // loop_body
      %s28 = ssub.s32 %s23, 1
      %s29 = ssub.s32 %s23, 2
      %s30 = sadd.s32 %s23, 1
      %s31 = ssub.s32 %s23, %s30
      %p32 = scmp.eq.s32.totalorder %s31, 0
      %s34 = sadd.s32 %s33, 1
      %s35 = scalar_select %p32, %s33, %s34
      %p38 = pneg %p32
      %p39 = scmp.eq.s32.totalorder %s23, 1
      %p40 = por %p38, %p39
      %p41 = scmp.ne.s32.totalorder %s33, %s36
      %p42 = scmp.eq.s32.totalorder %s23, 0
      %p43 = por %p41, %p42
      %p44 = scmp.ne.s32.totalorder %s33, %s36
      %p45 = scmp.eq.s32.totalorder %s28, 1
      %p46 = por %p44, %p45
      %p47 = scmp.ne.s32.totalorder %s36, %s37
      %p48 = scmp.eq.s32.totalorder %s28, 0
      %p49 = por %p47, %p48
      %p50 = scmp.ne.s32.totalorder %s36, %s37
      %p51 = scmp.eq.s32.totalorder %s29, 1
      %p52 = por %p50, %p51
      %p54 = scmp.ne.s32.totalorder %s37, %s53
      %p55 = scmp.eq.s32.totalorder %s29, 0
      %p56 = por %p54, %p55
      %s58 = sadd.s32 %s57, 1
      %p61 = scmp.eq.s32.totalorder %s23, 1
      %p62 = scmp.ne.s32.totalorder %s57, %s59
      %p63 = scmp.eq.s32.totalorder %s23, 0
      %p64 = por %p62, %p63
      %p65 = scmp.ne.s32.totalorder %s57, %s59
      %p66 = scmp.eq.s32.totalorder %s28, 1
      %p67 = por %p65, %p66
      %p68 = scmp.ne.s32.totalorder %s59, %s60
      %p69 = scmp.eq.s32.totalorder %s28, 0
      %p70 = por %p68, %p69
      %p71 = scmp.ne.s32.totalorder %s59, %s60
      %p72 = scmp.eq.s32.totalorder %s29, 1
      %p73 = por %p71, %p72
      %p75 = scmp.ne.s32.totalorder %s60, %s74
      %p76 = scmp.eq.s32.totalorder %s29, 0
      %p77 = por %p75, %p76
      %s79 = sadd.s32 %s78, 1
      %p82 = scmp.eq.s32.totalorder %s23, 1
      %p83 = scmp.ne.s32.totalorder %s78, %s80
      %p84 = scmp.eq.s32.totalorder %s23, 0
      %p85 = por %p83, %p84
      %p86 = scmp.ne.s32.totalorder %s78, %s80
      %p87 = scmp.eq.s32.totalorder %s28, 1
      %p88 = por %p86, %p87
      %p89 = scmp.ne.s32.totalorder %s80, %s81
      %p90 = scmp.eq.s32.totalorder %s28, 0
      %p91 = por %p89, %p90
      %p92 = scmp.ne.s32.totalorder %s80, %s81
      %p93 = scmp.eq.s32.totalorder %s29, 1
      %p94 = por %p92, %p93
      %p96 = scmp.ne.s32.totalorder %s81, %s95
      %p97 = scmp.eq.s32.totalorder %s29, 0
      %p98 = por %p96, %p97
      %s100 = sadd.s32 %s99, 1
      %p103 = scmp.eq.s32.totalorder %s23, 1
      %p104 = scmp.ne.s32.totalorder %s99, %s101
      %p105 = scmp.eq.s32.totalorder %s23, 0
      %p106 = por %p104, %p105
      %p107 = scmp.ne.s32.totalorder %s99, %s101
      %p108 = scmp.eq.s32.totalorder %s28, 1
      %p109 = por %p107, %p108
      %p110 = scmp.ne.s32.totalorder %s101, %s102
      %p111 = scmp.eq.s32.totalorder %s28, 0
      %p112 = por %p110, %p111
      %p113 = scmp.ne.s32.totalorder %s101, %s102
      %p114 = scmp.eq.s32.totalorder %s29, 1
      %p115 = por %p113, %p114
      %p117 = scmp.ne.s32.totalorder %s102, %s116
      %p118 = scmp.eq.s32.totalorder %s29, 0
      %p119 = por %p117, %p118
      %s121 = sadd.s32 %s120, 1
      %p124 = scmp.eq.s32.totalorder %s23, 1
      %p125 = scmp.ne.s32.totalorder %s120, %s122
      %p126 = scmp.eq.s32.totalorder %s23, 0
      %p127 = por %p125, %p126
      %p128 = scmp.ne.s32.totalorder %s120, %s122
      %p129 = scmp.eq.s32.totalorder %s28, 1
      %p130 = por %p128, %p129
      %p131 = scmp.ne.s32.totalorder %s122, %s123
      %p132 = scmp.eq.s32.totalorder %s28, 0
      %p133 = por %p131, %p132
      %p134 = scmp.ne.s32.totalorder %s122, %s123
      %p135 = scmp.eq.s32.totalorder %s29, 1
      %p136 = por %p134, %p135
      %p138 = scmp.ne.s32.totalorder %s123, %s137
      %p139 = scmp.eq.s32.totalorder %s29, 0
      %p140 = por %p138, %p139
      %s142 = sadd.s32 %s141, 1
      %p145 = scmp.eq.s32.totalorder %s23, 1
      %p146 = scmp.ne.s32.totalorder %s141, %s143
      %p147 = scmp.eq.s32.totalorder %s23, 0
      %p148 = por %p146, %p147
      %p149 = scmp.ne.s32.totalorder %s141, %s143
      %p150 = scmp.eq.s32.totalorder %s28, 1
      %p151 = por %p149, %p150
      %p152 = scmp.ne.s32.totalorder %s143, %s144
      %p153 = scmp.eq.s32.totalorder %s28, 0
      %p154 = por %p152, %p153
      %p155 = scmp.ne.s32.totalorder %s143, %s144
      %p156 = scmp.eq.s32.totalorder %s29, 1
      %p157 = por %p155, %p156
      %p159 = scmp.ne.s32.totalorder %s144, %s158
      %p160 = scmp.eq.s32.totalorder %s29, 0
      %p161 = por %p159, %p160
      %s163 = sadd.s32 %s162, 1
      %p166 = scmp.eq.s32.totalorder %s23, 1
      %p167 = scmp.ne.s32.totalorder %s162, %s164
      %p168 = scmp.eq.s32.totalorder %s23, 0
      %p169 = por %p167, %p168
      %p170 = scmp.ne.s32.totalorder %s162, %s164
      %p171 = scmp.eq.s32.totalorder %s28, 1
      %p172 = por %p170, %p171
      %p173 = scmp.ne.s32.totalorder %s164, %s165
      %p174 = scmp.eq.s32.totalorder %s28, 0
      %p175 = por %p173, %p174
      %p176 = scmp.ne.s32.totalorder %s164, %s165
      %p177 = scmp.eq.s32.totalorder %s29, 1
      %p178 = por %p176, %p177
      %p180 = scmp.ne.s32.totalorder %s165, %s179
      %p181 = scmp.eq.s32.totalorder %s29, 0
      %p182 = por %p180, %p181
      %s184 = sadd.s32 %s183, 1
      %p187 = scmp.eq.s32.totalorder %s23, 1
      %p188 = scmp.ne.s32.totalorder %s183, %s185
      %p189 = scmp.eq.s32.totalorder %s23, 0
      %p190 = por %p188, %p189
      %p191 = scmp.ne.s32.totalorder %s183, %s185
      %p192 = scmp.eq.s32.totalorder %s28, 1
      %p193 = por %p191, %p192
      %p194 = scmp.ne.s32.totalorder %s185, %s186
      %p195 = scmp.eq.s32.totalorder %s28, 0
      %p196 = por %p194, %p195
      %p197 = scmp.ne.s32.totalorder %s185, %s186
      %p198 = scmp.eq.s32.totalorder %s29, 1
      %p199 = por %p197, %p198
      %p201 = scmp.ne.s32.totalorder %s186, %s200
      %p202 = scmp.eq.s32.totalorder %s29, 0
      %p203 = por %p201, %p202
      %s205 = sadd.s32 %s204, 1
      %p208 = scmp.eq.s32.totalorder %s23, 1
      %p209 = scmp.ne.s32.totalorder %s204, %s206
      %p210 = scmp.eq.s32.totalorder %s23, 0
      %p211 = por %p209, %p210
      %p212 = scmp.ne.s32.totalorder %s204, %s206
      %p213 = scmp.eq.s32.totalorder %s28, 1
      %p214 = por %p212, %p213
      %p215 = scmp.ne.s32.totalorder %s206, %s207
      %p216 = scmp.eq.s32.totalorder %s28, 0
      %p217 = por %p215, %p216
      %p218 = scmp.ne.s32.totalorder %s206, %s207
      %p219 = scmp.eq.s32.totalorder %s29, 1
      %p220 = por %p218, %p219
      %p222 = scmp.ne.s32.totalorder %s207, %s221
      %p223 = scmp.eq.s32.totalorder %s29, 0
      %p224 = por %p222, %p223
      %s226 = sadd.s32 %s225, 1
      %p229 = scmp.eq.s32.totalorder %s23, 1
      %p230 = scmp.ne.s32.totalorder %s225, %s227
      %p231 = scmp.eq.s32.totalorder %s23, 0
      %p232 = por %p230, %p231
      %p233 = scmp.ne.s32.totalorder %s225, %s227
      %p234 = scmp.eq.s32.totalorder %s28, 1
      %p235 = por %p233, %p234
      %p236 = scmp.ne.s32.totalorder %s227, %s228
      %p237 = scmp.eq.s32.totalorder %s28, 0
      %p238 = por %p236, %p237
      %p239 = scmp.ne.s32.totalorder %s227, %s228
      %p240 = scmp.eq.s32.totalorder %s29, 1
      %p241 = por %p239, %p240
      %p243 = scmp.ne.s32.totalorder %s228, %s242
      %p244 = scmp.eq.s32.totalorder %s29, 0
      %p245 = por %p243, %p244
      %s246 = ssub.s32 %s23, %s30
      %p247 = scmp.eq.s32.totalorder %s246, 0
      %s249 = sadd.s32 %s248, 1
      %s250 = scalar_select %p247, %s248, %s249
      %p253 = pneg %p247
      %p254 = scmp.eq.s32.totalorder %s23, 1
      %p255 = por %p253, %p254
      %p256 = scmp.ne.s32.totalorder %s248, %s251
      %p257 = scmp.eq.s32.totalorder %s23, 0
      %p258 = por %p256, %p257
      %p259 = scmp.ne.s32.totalorder %s248, %s251
      %p260 = scmp.eq.s32.totalorder %s28, 1
      %p261 = por %p259, %p260
      %p262 = scmp.ne.s32.totalorder %s251, %s252
      %p263 = scmp.eq.s32.totalorder %s28, 0
      %p264 = por %p262, %p263
      %p265 = scmp.ne.s32.totalorder %s251, %s252
      %p266 = scmp.eq.s32.totalorder %s29, 1
      %p267 = por %p265, %p266
      %p269 = scmp.ne.s32.totalorder %s252, %s268
      %p270 = scmp.eq.s32.totalorder %s29, 0
      %p271 = por %p269, %p270
      %p272 = scmp.le.s32.totalorder 1, %s23
      %p273 = scmp.lt.s32.totalorder %s23, 3
      %p274 = pnand %p272, %p273
      %p275 = pneg %p274
      // Predicated region
      $region9: #{tpu_custom_call.1} parent=5 // pred_check
        _
      $region10: #{tpu_custom_call.1} parent=5 // pred_check_branch
        %277 = sbr.rel (%p274) target = $region12
      $region11: #{tpu_custom_call.1} parent=5 // pred_region
        %s278 = ssub.s32 %s23, 1
        // Predicated region
        $region13: #{tpu_custom_call.1} parent=11 // pred_check
          %p279 = pneg %p70
        $region14: #{tpu_custom_call.1} parent=11 // pred_check_branch
          %281 = sbr.rel (%p279) target = $region16
        $region15: #{tpu_custom_call.1} parent=11 // pred_region
          %s283 = ssub.s32 1024, 1024
          %284 = vsyncadd [#allocation6], %s283
          %s285 = sshll.u32 [#allocation5], 4
          %s286 = int_to_ptr.vmem [resolvable:$true] %s285
          %291 = dma.hbm_to_vmem [thread:$0]  %s1, 1024, %s286, [#allocation6], 256, 256, 16
        $region16: #{tpu_custom_call.1} parent=11 // pred_fallthru
          _
        // Predicated region
        $region17: #{tpu_custom_call.1} parent=11 // pred_check
          %p292 = pneg %p91
        $region18: #{tpu_custom_call.1} parent=11 // pred_check_branch
          %294 = sbr.rel (%p292) target = $region20
        $region19: #{tpu_custom_call.1} parent=11 // pred_region
          _
        $region20: #{tpu_custom_call.1} parent=11 // pred_fallthru
          _
        // Predicated region
        $region21: #{tpu_custom_call.1} parent=11 // pred_check
          %p295 = pneg %p112
        $region22: #{tpu_custom_call.1} parent=11 // pred_check_branch
          %297 = sbr.rel (%p295) target = $region24
        $region23: #{tpu_custom_call.1} parent=11 // pred_region
          _
        $region24: #{tpu_custom_call.1} parent=11 // pred_fallthru
          _
        // Predicated region
        $region25: #{tpu_custom_call.1} parent=11 // pred_check
          %p298 = pneg %p133
        $region26: #{tpu_custom_call.1} parent=11 // pred_check_branch
          %300 = sbr.rel (%p298) target = $region28
        $region27: #{tpu_custom_call.1} parent=11 // pred_region
          %s302 = ssub.s32 2048, 2048
          %303 = vsyncadd [#allocation6], %s302
          %s304 = sshll.u32 [#allocation7], 4
          %s305 = int_to_ptr.vmem [resolvable:$true] %s304
          %310 = dma.hbm_to_vmem [thread:$0]  %s4, 2048, %s305, [#allocation6], 128, 128, 8
        $region28: #{tpu_custom_call.1} parent=11 // pred_fallthru
          _
        // Predicated region
        $region29: #{tpu_custom_call.1} parent=11 // pred_check
          %p311 = pneg %p154
        $region30: #{tpu_custom_call.1} parent=11 // pred_check_branch
          %313 = sbr.rel (%p311) target = $region32
        $region31: #{tpu_custom_call.1} parent=11 // pred_region
          _
        $region32: #{tpu_custom_call.1} parent=11 // pred_fallthru
          _
        // Predicated region
        $region33: #{tpu_custom_call.1} parent=11 // pred_check
          %p314 = pneg %p175
        $region34: #{tpu_custom_call.1} parent=11 // pred_check_branch
          %316 = sbr.rel (%p314) target = $region36
        $region35: #{tpu_custom_call.1} parent=11 // pred_region
          _
        $region36: #{tpu_custom_call.1} parent=11 // pred_fallthru
          _
        // Predicated region
        $region37: #{tpu_custom_call.1} parent=11 // pred_check
          %p317 = pneg %p196
        $region38: #{tpu_custom_call.1} parent=11 // pred_check_branch
          %319 = sbr.rel (%p317) target = $region40
        $region39: #{tpu_custom_call.1} parent=11 // pred_region
          _
        $region40: #{tpu_custom_call.1} parent=11 // pred_fallthru
          _
        // Predicated region
        $region41: #{tpu_custom_call.1} parent=11 // pred_check
          %p320 = pneg %p217
        $region42: #{tpu_custom_call.1} parent=11 // pred_check_branch
          %322 = sbr.rel (%p320) target = $region44
        $region43: #{tpu_custom_call.1} parent=11 // pred_region
          _
        $region44: #{tpu_custom_call.1} parent=11 // pred_fallthru
          _
        // Predicated region
        $region45: #{tpu_custom_call.1} parent=11 // pred_check
          %p323 = pneg %p238
        $region46: #{tpu_custom_call.1} parent=11 // pred_check_branch
          %325 = sbr.rel (%p323) target = $region48
        $region47: #{tpu_custom_call.1} parent=11 // pred_region
          _
        $region48: #{tpu_custom_call.1} parent=11 // pred_fallthru
          _
      $region12: #{tpu_custom_call.1} parent=5 // pred_fallthru
        _
      %p326 = scmp.lt.s32.totalorder %s23, 2
      // Predicated region
      $region49: #{tpu_custom_call.1} parent=5 // pred_check
        %p327 = pneg %p326
      $region50: #{tpu_custom_call.1} parent=5 // pred_check_branch
        %329 = sbr.rel (%p327) target = $region52
      $region51: #{tpu_custom_call.1} parent=5 // pred_region
        // Predicated region
        $region53: #{tpu_custom_call.1} parent=51 // pred_check
          %p330 = pneg %p43
        $region54: #{tpu_custom_call.1} parent=51 // pred_check_branch
          %332 = sbr.rel (%p330) target = $region56
        $region55: #{tpu_custom_call.1} parent=51 // pred_region
          %s333 = sand.u32 %s33, 1
          %s334 = scalar_lea.sflag [#allocation3], %s333
          %s335 = sand.u32 %s33, 1
          %s336 = smul.addr %s335, 8
          %s337 = scalar_lea.vmem [#allocation2], %s336
          %s339 = ssub.s32 128, 128
          %340 = vsyncadd %s334, %s339
          %s341 = smul.addr %s23, 128
          %s342 = scalar_lea.hbm %s0, %s341
          %s344 = sshll.u32 %s337, 4
          %s345 = int_to_ptr.vmem [resolvable:$true] %s344
          %347 = dma.hbm_to_vmem [thread:$0]  %s342, 128, %s345, %s334
        $region56: #{tpu_custom_call.1} parent=51 // pred_fallthru
          _
      $region52: #{tpu_custom_call.1} parent=5 // pred_fallthru
        _
      %p348 = scmp.le.s32.totalorder 1, %s23
      %p349 = scmp.lt.s32.totalorder %s23, 3
      %p350 = pnand %p348, %p349
      %p351 = pneg %p350
      // Predicated region
      $region57: #{tpu_custom_call.1} parent=5 // pred_check
        _
      $region58: #{tpu_custom_call.1} parent=5 // pred_check_branch
        %353 = sbr.rel (%p350) target = $region60
      $region59: #{tpu_custom_call.1} parent=5 // pred_region
        %s354 = ssub.s32 %s23, 1
        %s355 = sand.u32 %s36, 1
        %s356 = scalar_lea.sflag [#allocation3], %s355
        %s357 = sand.u32 %s36, 1
        %s358 = smul.addr %s357, 8
        %s359 = scalar_lea.vmem [#allocation2], %s358
        // Predicated region
        $region61: #{tpu_custom_call.1} parent=59 // pred_check
          %p360 = pneg %p49
        $region62: #{tpu_custom_call.1} parent=59 // pred_check_branch
          %362 = sbr.rel (%p360) target = $region64
        $region63: #{tpu_custom_call.1} parent=59 // pred_region
          %363 = dma.done %s356, 128
        $region64: #{tpu_custom_call.1} parent=59 // pred_fallthru
          _
        // Predicated region
        $region65: #{tpu_custom_call.1} parent=59 // pred_check
          %p364 = pneg %p70
        $region66: #{tpu_custom_call.1} parent=59 // pred_check_branch
          %366 = sbr.rel (%p364) target = $region68
        $region67: #{tpu_custom_call.1} parent=59 // pred_region
          %367 = dma.done [#allocation6], 1024
        $region68: #{tpu_custom_call.1} parent=59 // pred_fallthru
          _
        // Predicated region
        $region69: #{tpu_custom_call.1} parent=59 // pred_check
          %p368 = pneg %p133
        $region70: #{tpu_custom_call.1} parent=59 // pred_check_branch
          %370 = sbr.rel (%p368) target = $region72
        $region71: #{tpu_custom_call.1} parent=59 // pred_region
          %371 = dma.done [#allocation6], 2048
        $region72: #{tpu_custom_call.1} parent=59 // pred_fallthru
          _
        %s372 = sand.u32 %s36, 1
        %s373 = scalar_lea.sflag [#allocation3], %s372
        %s374 = sand.u32 %s36, 1
        %s375 = smul.addr %s374, 8
        %s376 = scalar_lea.vmem [#allocation2], %s375
        %p377 = pneg %p49
        %p378 = pneg %p46
        %p379 = pneg %p70
        %p380 = pneg %p67
        %p381 = pneg %p91
        %p382 = pneg %p88
        %p383 = pneg %p112
        %p384 = pneg %p109
        %p385 = pneg %p133
        %p386 = pneg %p130
        %p387 = pneg %p154
        %p388 = pneg %p151
        %p389 = pneg %p175
        %p390 = pneg %p172
        %p391 = pneg %p196
        %p392 = pneg %p193
        %p393 = pneg %p217
        %p394 = pneg %p214
        %p395 = pneg %p238
        %p396 = pneg %p235
        %p397 = pneg %p264
        %p398 = pneg %p261
        %s399 = sand.u32 %s251, 1
        %s400 = scalar_lea.sflag [#allocation4], %s399
        %s401 = sand.u32 %s251, 1
        %s402 = smul.addr %s401, 8
        %s403 = scalar_lea.vmem [#allocation8], %s402
        %v404 = vld [vmem:[%s359] sm:$0xff]
        %vm405 = vcmask 261120
        %v406 = vsel %vm405, %v404, 0.0
        %407 = vadd.xlane.f32.xlu0 %v406
        %v408 = vpop.xlane.xlu0 %407
        %v409 = vrcp.pop 32.0
        %v410 = vmul.f32 %v408, %v409
        %v411 = vsub.f32 %v404, %v410
        %v412 = vmul.f32 %v411, %v411
        %v413 = vsel %vm405, %v412, 0.0
        %414 = vadd.xlane.f32.xlu0 %v413
        %v415 = vpop.xlane.xlu0 %414
        %v416 = vmul.f32 %v415, %v409
        %v417 = vadd.f32 %v416, 1e-05
        %v418 = vrsqrt.pop %v417
        %v419 = vld [vmem:[#allocation5] sm:$0xff]
        %v420 = vld [vmem:[#allocation5 + $0x8] sm:$0xff]
        %v421 = vld [vmem:[#allocation5 + $0x10] sm:$0xff]
        %v422 = vld [vmem:[#allocation5 + $0x18] sm:$0xff]
        %v423 = vld [vmem:[#allocation5 + $0x20] sm:$0xff]
        %v424 = vld [vmem:[#allocation5 + $0x28] sm:$0xff]
        %v425 = vld [vmem:[#allocation5 + $0x30] sm:$0xff]
        %v426 = vld [vmem:[#allocation5 + $0x38] sm:$0xff]
        %v428 = vsel %vm405, %v404, 0
        %430 = vmatprep.subr.mxu0 %v420
        %431 = vmatpush1.msra.mxu0 %v419
        %432 = vmatprep.subr.mxu0 %v422
        %433 = vmatpush1.msra.mxu0 %v421
        %434 = vmatprep.subr.mxu0 %v424
        %435 = vmatpush1.msra.mxu0 %v423
        %436 = vmatprep.subr.mxu0 %v426
        %437 = vmatpush1.msra.mxu0 %v425
        %438 = vmatprep.subr.mxu0 0.0
        %439 = vmatpush1.msra.mxu0 0.0
        %440 = vmatprep.subr.mxu0 0.0
        %441 = vmatpush1.msra.mxu0 0.0
        %442 = vmatprep.subr.mxu0 0.0
        %443 = vmatpush1.msra.mxu0 0.0
        %444 = vmatprep.subr.mxu0 0.0
        %445 = vmatpush1.msra.mxu0 0.0
        %446 = vmatprep.subr.mxu0 0.0
        %447 = vmatpush1.msra.mxu0 0.0
        %448 = vmatprep.subr.mxu0 0.0
        %449 = vmatpush1.msra.mxu0 0.0
        %450 = vmatprep.subr.mxu0 0.0
        %451 = vmatpush1.msra.mxu0 0.0
        %452 = vmatprep.subr.mxu0 0.0
        %453 = vmatpush1.msra.mxu0 0.0
        %454 = vmatprep.subr.mxu0 0.0
        %455 = vmatpush1.msra.mxu0 0.0
        %456 = vmatprep.subr.mxu0 0.0
        %457 = vmatpush1.msra.mxu0 0.0
        %458 = vmatprep.subr.mxu0 0.0
        %459 = vmatpush1.msra.mxu0 0.0
        %460 = vmatprep.subr.mxu0 0.0
        %461 = vmatpush1.msra.mxu0 0.0
        %462 = vmatprep.subr.mxu0 0.0
        %463 = vmatpush1.msra.mxu0 0.0
        %464 = vmatprep.subr.mxu0 0.0
        %465 = vmatpush1.msra.mxu0 0.0
        %466 = vmatprep.subr.mxu0 0.0
        %467 = vmatpush1.msra.mxu0 0.0
        %468 = vmatprep.subr.mxu0 0.0
        %469 = vmatpush1.msra.mxu0 0.0
        %470 = vmatprep.subr.mxu0 0.0
        %471 = vmatpush1.msra.mxu0 0.0
        %472 = vmatprep.subr.mxu0 0.0
        %473 = vmatpush1.msra.mxu0 0.0
        %474 = vmatprep.subr.mxu0 0.0
        %475 = vmatpush1.msra.mxu0 0.0
        %476 = vmatprep.subr.mxu0 0.0
        %477 = vmatpush1.msra.mxu0 0.0
        %478 = vmatprep.subr.mxu0 0.0
        %479 = vmatpush1.msra.mxu0 0.0
        %480 = vmatprep.subr.mxu0 0.0
        %481 = vmatpush1.msra.mxu0 0.0
        %482 = vmatprep.subr.mxu0 0.0
        %483 = vmatpush1.msra.mxu0 0.0
        %484 = vmatprep.subr.mxu0 0.0
        %485 = vmatpush1.msra.mxu0 0.0
        %486 = vmatprep.subr.mxu0 0.0
        %487 = vmatpush1.msra.mxu0 0.0
        %488 = vmatprep.subr.mxu0 0.0
        %489 = vmatpush1.msra.mxu0 0.0
        %490 = vmatprep.subr.mxu0 0.0
        %491 = vmatpush1.msra.mxu0 0.0
        %492 = vmatprep.subr.mxu0 0.0
        %493 = vmatpush1.msra.mxu0 0.0
        %494 = vmatprep.mubr.f32.mxu0 0.0
        %495 = vmatmul.mubr.f32.gmra.mrb[0].mxu0 %v428
        %v496 = vpop.f32.mrb[0].mxu0
        %v497 = vadd.f32 0.0, %v496
        %v498 = vpop.f32.mrb[0].mxu0
        %v499 = vadd.f32 0.0, %v498
        %500 = vdwg.mxu0
        %v501 = vmul.f32 %v418, %v497
        %v502 = vmul.f32 %v410, %v418
        %v503 = vld [vmem:[%s2] sm:$0x1]
        %v505 = vlaneseq
        %v506 = vshrl.u32 %v505, 7
        %v507 = vsub.s32 0, %v506
        %v508 = vrot.slane %v503, %v507
        %v510 = vmul.f32 %v502, %v508
        %v511 = vsub.f32 %v501, %v510
        %v512 = vld [vmem:[%s3] sm:$0x1]
        %v514 = vlaneseq
        %v515 = vshrl.u32 %v514, 7
        %v516 = vsub.s32 0, %v515
        %v517 = vrot.slane %v512, %v516
        %v519 = vadd.f32 %v511, %v517
        %v520 = vmax.f32 %v519, 0.0
        %v521 = vld [vmem:[#allocation7] sm:$0xff]
        %v522 = vld [vmem:[#allocation7 + $0x8] sm:$0xff]
        %v523 = vld [vmem:[#allocation7 + $0x10] sm:$0xff]
        %v524 = vld [vmem:[#allocation7 + $0x18] sm:$0xff]
        %v525 = vld [vmem:[#allocation7 + $0x20] sm:$0xff]
        %v526 = vld [vmem:[#allocation7 + $0x28] sm:$0xff]
        %v527 = vld [vmem:[#allocation7 + $0x30] sm:$0xff]
        %v528 = vld [vmem:[#allocation7 + $0x38] sm:$0xff]
        %v529 = vld [vmem:[#allocation7 + $0x40] sm:$0xff]
        %v530 = vld [vmem:[#allocation7 + $0x48] sm:$0xff]
        %v531 = vld [vmem:[#allocation7 + $0x50] sm:$0xff]
        %v532 = vld [vmem:[#allocation7 + $0x58] sm:$0xff]
        %v533 = vld [vmem:[#allocation7 + $0x60] sm:$0xff]
        %v534 = vld [vmem:[#allocation7 + $0x68] sm:$0xff]
        %v535 = vld [vmem:[#allocation7 + $0x70] sm:$0xff]
        %v536 = vld [vmem:[#allocation7 + $0x78] sm:$0xff]
        %v537 = vld [vmem:[%s5] sm:$0x1]
        %v539 = vlaneseq
        %v540 = vshrl.u32 %v539, 7
        %v541 = vsub.s32 0, %v540
        %v542 = vrot.slane %v537, %v541
        %544 = vmatprep.subr.mxu0 0.0
        %545 = vmatpush1.msra.mxu0 %v521
        %546 = vmatprep.subr.mxu0 0.0
        %547 = vmatpush1.msra.mxu0 %v522
        %548 = vmatprep.subr.mxu0 0.0
        %549 = vmatpush1.msra.mxu0 %v523
        %550 = vmatprep.subr.mxu0 0.0
        %551 = vmatpush1.msra.mxu0 %v524
        %552 = vmatprep.subr.mxu0 0.0
        %553 = vmatpush1.msra.mxu0 %v525
        %554 = vmatprep.subr.mxu0 0.0
        %555 = vmatpush1.msra.mxu0 %v526
        %556 = vmatprep.subr.mxu0 0.0
        %557 = vmatpush1.msra.mxu0 %v527
        %558 = vmatprep.subr.mxu0 0.0
        %559 = vmatpush1.msra.mxu0 %v528
        %560 = vmatprep.subr.mxu0 0.0
        %561 = vmatpush1.msra.mxu0 %v529
        %562 = vmatprep.subr.mxu0 0.0
        %563 = vmatpush1.msra.mxu0 %v530
        %564 = vmatprep.subr.mxu0 0.0
        %565 = vmatpush1.msra.mxu0 %v531
        %566 = vmatprep.subr.mxu0 0.0
        %567 = vmatpush1.msra.mxu0 %v532
        %568 = vmatprep.subr.mxu0 0.0
        %569 = vmatpush1.msra.mxu0 %v533
        %570 = vmatprep.subr.mxu0 0.0
        %571 = vmatpush1.msra.mxu0 %v534
        %572 = vmatprep.subr.mxu0 0.0
        %573 = vmatpush1.msra.mxu0 %v535
        %574 = vmatprep.subr.mxu0 0.0
        %575 = vmatpush1.msra.mxu0 %v536
        %576 = vmatprep.subr.mxu0 0.0
        %577 = vmatpush1.msra.mxu0 0.0
        %578 = vmatprep.subr.mxu0 0.0
        %579 = vmatpush1.msra.mxu0 0.0
        %580 = vmatprep.subr.mxu0 0.0
        %581 = vmatpush1.msra.mxu0 0.0
        %582 = vmatprep.subr.mxu0 0.0
        %583 = vmatpush1.msra.mxu0 0.0
        %584 = vmatprep.subr.mxu0 0.0
        %585 = vmatpush1.msra.mxu0 0.0
        %586 = vmatprep.subr.mxu0 0.0
        %587 = vmatpush1.msra.mxu0 0.0
        %588 = vmatprep.subr.mxu0 0.0
        %589 = vmatpush1.msra.mxu0 0.0
        %590 = vmatprep.subr.mxu0 0.0
        %591 = vmatpush1.msra.mxu0 0.0
        %592 = vmatprep.subr.mxu0 0.0
        %593 = vmatpush1.msra.mxu0 0.0
        %594 = vmatprep.subr.mxu0 0.0
        %595 = vmatpush1.msra.mxu0 0.0
        %596 = vmatprep.subr.mxu0 0.0
        %597 = vmatpush1.msra.mxu0 0.0
        %598 = vmatprep.subr.mxu0 0.0
        %599 = vmatpush1.msra.mxu0 0.0
        %600 = vmatprep.subr.mxu0 0.0
        %601 = vmatpush1.msra.mxu0 0.0
        %602 = vmatprep.subr.mxu0 0.0
        %603 = vmatpush1.msra.mxu0 0.0
        %604 = vmatprep.subr.mxu0 0.0
        %605 = vmatpush1.msra.mxu0 0.0
        %606 = vmatprep.subr.mxu0 0.0
        %607 = vmatpush1.msra.mxu0 0.0
        %608 = vmatprep.mubr.f32.mxu0 0.0
        %609 = vmatmul.mubr.f32.gmra.mrb[0].mxu0 %v520
        %v610 = vpop.f32.mrb[0].mxu0
        %v611 = vadd.f32 %v542, %v610
        %v612 = vpop.f32.mrb[0].mxu0
        %613 = vdwg.mxu0
        %614 = vadd.xlane.f32.xlu0 %v611
        %v615 = vpop.xlane.xlu0 %614
        %v616 = vmul.f32 %v615, 0.015625
        %v617 = vsub.f32 %v611, %v616
        %v618 = vld [vmem:[%s8] sm:$0x1]
        %v620 = vlaneseq
        %v621 = vshrl.u32 %v620, 7
        %v622 = vsub.s32 0, %v621
        %v623 = vrot.slane %v618, %v622
        %v625 = vmul.f32 %v617, %v623
        %v626 = vmul.f32 %v625, %v625
        %627 = vadd.xlane.f32.xlu0 %v626
        %v628 = vpop.xlane.xlu0 %627
        %v629 = vmul.f32 %v628, 0.015625
        %v630 = vadd.f32 %v629, 1e-05
        %v631 = vrsqrt.pop %v630
        %v632 = vmul.f32 %v625, %v631
        %v633 = vld [vmem:[%s6] sm:$0x1]
        %v635 = vlaneseq
        %v636 = vshrl.u32 %v635, 7
        %v637 = vsub.s32 0, %v636
        %v638 = vrot.slane %v633, %v637
        %v640 = vmul.f32 %v632, %v638
        %v641 = vld [vmem:[%s7] sm:$0x1]
        %v643 = vlaneseq
        %v644 = vshrl.u32 %v643, 7
        %v645 = vsub.s32 0, %v644
        %v646 = vrot.slane %v641, %v645
        %v648 = vadd.f32 %v640, %v646
        %v649 = vadd.f32 %v648, %v499
        %v650 = vld [vmem:[%s9] sm:$0x1]
        %v652 = vlaneseq
        %v653 = vshrl.u32 %v652, 7
        %v654 = vsub.s32 0, %v653
        %v655 = vrot.slane %v650, %v654
        %v657 = vadd.f32 %v649, %v655
        %658 = vst [vmem:[%s403] sm:$0xff] %v657
        %s659 = sand.u32 %s251, 1
        %s660 = scalar_lea.sflag [#allocation4], %s659
        %s661 = sand.u32 %s251, 1
        %s662 = smul.addr %s661, 8
        %s663 = scalar_lea.vmem [#allocation8], %s662
        // Predicated region
        $region73: #{tpu_custom_call.1} parent=59 // pred_check
          %p664 = pneg %p261
        $region74: #{tpu_custom_call.1} parent=59 // pred_check_branch
          %666 = sbr.rel (%p664) target = $region76
        $region75: #{tpu_custom_call.1} parent=59 // pred_region
          %s668 = ssub.s32 128, 128
          %669 = vsyncadd %s660, %s668
          %s670 = smul.addr %s28, 128
          %s671 = scalar_lea.hbm %s10, %s670
          %s673 = sshll.u32 %s663, 4
          %s674 = int_to_ptr.vmem [resolvable:$true] %s673
          %676 = dma.vmem_to_hbm [thread:$0]  %s674, 128, %s671, %s660
        $region76: #{tpu_custom_call.1} parent=59 // pred_fallthru
          _
      $region60: #{tpu_custom_call.1} parent=5 // pred_fallthru
        _
      %p677 = scmp.le.s32.totalorder 2, %s23
      // Predicated region
      $region77: #{tpu_custom_call.1} parent=5 // pred_check
        %p678 = pneg %p677
      $region78: #{tpu_custom_call.1} parent=5 // pred_check_branch
        %680 = sbr.rel (%p678) target = $region80
      $region79: #{tpu_custom_call.1} parent=5 // pred_region
        %s681 = ssub.s32 %s23, 2
        // Predicated region
        $region81: #{tpu_custom_call.1} parent=79 // pred_check
          %p682 = pneg %p267
        $region82: #{tpu_custom_call.1} parent=79 // pred_check_branch
          %684 = sbr.rel (%p682) target = $region84
        $region83: #{tpu_custom_call.1} parent=79 // pred_region
          %s685 = sand.u32 %s252, 1
          %s686 = scalar_lea.sflag [#allocation4], %s685
          %s687 = sand.u32 %s252, 1
          %s688 = smul.addr %s687, 8
          %s689 = scalar_lea.vmem [#allocation8], %s688
          %690 = dma.done %s686, 128
        $region84: #{tpu_custom_call.1} parent=79 // pred_fallthru
          _
      $region80: #{tpu_custom_call.1} parent=5 // pred_fallthru
        _
    $region6: #{tpu_custom_call.1} parent=1 // loop_footer
      %s27 = sadd.s32 1, %s23
    $region7: #{tpu_custom_call.1} parent=1 // loop_footer_branch
      %22 = sbr.rel target = $region3
    $region8: #{tpu_custom_call.1} parent=1 // loop_exit
      _
    %691 = vsyncpa [#allocation3], 1
    %s692 = scalar_lea.sflag [#allocation3], 1
    %693 = vsyncpa %s692, 1
    %694 = vsyncpa [#allocation6], 1
    %695 = vsyncpa [#allocation4], 1
    %s696 = scalar_lea.sflag [#allocation4], 1
    %697 = vsyncpa %s696, 1

</llo_original>
